<compile_context>
chip_gen: v7x
topology: tpu7x:2x2x1
jax: 0.10.0
libtpu: 0.0.40
codegen_flags: <defaults>
</compile_context>

<pallas_src>
import jax
import jax.numpy as jnp
from jax.experimental import pallas as pl
from jax.experimental.pallas import tpu as pltpu

_SQRT2 = 1.4142135623730951      # scale b = sigma / sqrt(2)  ->  1/b = sqrt(2) / sigma

_LANE = 1024                     # lane (last) dim of every block: multiple of 128
_MAX_BLOCK_ROWS = 1024           # up to 1024*1024*4 B = 4 MiB per stream per tile
_VMEM_LIMIT_BYTES = 48 * 1024 * 1024   # 4 streams x 2 bufs x 4 MiB = 32 MiB < 48 MiB


def _laplace_interval_kernel(y_ref, mu_ref, sigma_ref, out_ref):
    """Element-wise streaming kernel on one (rows, _LANE) tile.

    Laplace CDF in closed form:
        cdf(z; b) = 1 - 0.5*exp(-z/b)   for z >= 0
                  =     0.5*exp(+z/b)   for z <  0
    abs/select/mul are VPU, exp + reciprocal go to the EUP slot -> HBM-bound.
    """
    y = y_ref[...].astype(jnp.float32)
    mu = mu_ref[...].astype(jnp.float32)
    sigma = sigma_ref[...].astype(jnp.float32)

    inv_b = _SQRT2 * pl.reciprocal(sigma, approx=False)   # 1 / scale, full precision

    d = y - mu
    d_hi = d + 0.5
    d_lo = d - 0.5

    e_hi = 0.5 * jnp.exp(-jnp.abs(d_hi) * inv_b)
    e_lo = 0.5 * jnp.exp(-jnp.abs(d_lo) * inv_b)
    cdf_hi = jnp.where(d_hi >= 0.0, 1.0 - e_hi, e_hi)
    cdf_lo = jnp.where(d_lo >= 0.0, 1.0 - e_lo, e_lo)

    out_ref[...] = (cdf_hi - cdf_lo).astype(out_ref.dtype)


def _laplace_cdf_ref(z, scale):
    """expm1-based Laplace CDF (matches torch.distributions.Laplace.cdf)."""
    return 0.5 - 0.5 * jnp.sign(z) * jnp.expm1(-jnp.abs(z) / scale)


def hyperprior_proba_model(y, mu, sigma):
    """JAX/Pallas equivalent of Hyperprior_Proba_Model.forward.

    Args:
        y, mu, sigma: arrays of identical shape (e.g. NCHW (B, C, H, W)), sigma > 0.
    Returns:
        proba: same shape as y; dtype = promoted input dtype.
    """
    assert y.shape == mu.shape == sigma.shape, "y, mu, sigma must share a shape"
    orig_shape = y.shape
    total = y.size
    out_dtype = jnp.result_type(y.dtype, mu.dtype, sigma.dtype)

    y_flat = jnp.ravel(y)
    mu_flat = jnp.ravel(mu)
    sigma_flat = jnp.ravel(sigma)

    rows = total // _LANE           # aligned bulk, processed by the kernel
    bulk = rows * _LANE
    tail = total - bulk             # < _LANE ragged tail, processed with plain jnp

    pieces = []

    if rows > 0:
        # ---- lane-dense view of the aligned bulk (layout plumbing only) -------
        def _view(a):
            a = a if tail == 0 else jax.lax.slice(a, (0,), (bulk,))
            return a.reshape(rows, _LANE)

        y2, mu2, s2 = _view(y_flat), _view(mu_flat), _view(sigma_flat)

        # Block rows: multiple of 8 (or the full extent when rows <= 8); keep at
        # least 2 grid steps when possible so v7x can shard across its two TCs.
        if rows <= 8:
            block_rows = rows
        else:
            half = -(-rows // 2)            # ceil(rows / 2)
            half = -(-half // 8) * 8        # round up to a multiple of 8
            block_rows = max(8, min(_MAX_BLOCK_ROWS, half))

        grid = (pl.cdiv(rows, block_rows),)   # partial last block handled by Pallas
        spec = pl.BlockSpec((block_rows, _LANE), lambda i: (i, 0))

        in_bytes = sum(int(jnp.dtype(a.dtype).itemsize) for a in (y, mu, sigma))
        out_bytes = int(jnp.dtype(out_dtype).itemsize)
        cost = pl.CostEstimate(
            flops=15 * bulk,
            transcendentals=3 * bulk,                 # 2 exp + 1 reciprocal / elem
            bytes_accessed=bulk * (in_bytes + out_bytes),
        )

        bulk_out = pl.pallas_call(
            _laplace_interval_kernel,
            out_shape=jax.ShapeDtypeStruct((rows, _LANE), out_dtype),
            grid_spec=pltpu.PrefetchScalarGridSpec(
                num_scalar_prefetch=0,
                grid=grid,
                in_specs=[spec, spec, spec],
                out_specs=spec,
            ),
            compiler_params=pltpu.CompilerParams(
                # Independent streaming chunks -> shard across v7x's two TensorCores.
                dimension_semantics=("parallel",),
                vmem_limit_bytes=_VMEM_LIMIT_BYTES,
            ),
            cost_estimate=cost,
        )(y2, mu2, s2)
        pieces.append(bulk_out.reshape(-1))

    if tail > 0:
        # Ragged tail (< 1024 elements): plain jnp, negligible cost.
        ty = y_flat[bulk:].astype(jnp.float32)
        tm = mu_flat[bulk:].astype(jnp.float32)
        ts = sigma_flat[bulk:].astype(jnp.float32)
        scale = ts / jnp.float32(_SQRT2)
        tail_out = (_laplace_cdf_ref(ty + 0.5 - tm, scale)
                    - _laplace_cdf_ref(ty - 0.5 - tm, scale)).astype(out_dtype)
        pieces.append(tail_out)

    out = pieces[0] if len(pieces) == 1 else jnp.concatenate(pieces)
    return out.reshape(orig_shape)


def _reference(y, mu, sigma):
    """Pure-JAX reference matching torch.distributions.Laplace.cdf exactly."""
    y = y.astype(jnp.float32)
    mu = mu.astype(jnp.float32)
    sigma = sigma.astype(jnp.float32)
    scale = sigma / jnp.sqrt(jnp.float32(2.0))
    return (_laplace_cdf_ref(y + 0.5 - mu, scale)
            - _laplace_cdf_ref(y - 0.5 - mu, scale))


if __name__ == "__main__":
    key = jax.random.PRNGKey(0)

    def make_inputs(shape, k):
        k_y, k_mu, k_s = jax.random.split(k, 3)
        y = jnp.round(jax.random.normal(k_y, shape, dtype=jnp.float32) * 3.0)
        mu = jax.random.normal(k_mu, shape, dtype=jnp.float32)
        sigma = jnp.exp(0.5 * jax.random.normal(k_s, shape, dtype=jnp.float32))
        return y, mu, sigma

    # Aligned case (total % 1024 == 0): kernel handles everything.
    B, C, H, W = 2, 4, 16, 16
    y, mu, sigma = make_inputs((B, C, H, W), key)
    proba = jax.block_until_ready(hyperprior_proba_model(y, mu, sigma))
    proba_ref = _reference(y, mu, sigma)
    assert proba.shape == (B, C, H, W)
    assert bool(jnp.all(jnp.isfinite(proba)))
    assert jnp.allclose(proba, proba_ref, rtol=1e-5, atol=1e-6), float(
        jnp.max(jnp.abs(proba - proba_ref)))

    # Ragged case (total % 1024 != 0): kernel bulk + jnp tail.
    y2, mu2, sigma2 = make_inputs((3, 5, 7, 11), jax.random.PRNGKey(1))
    proba2 = jax.block_until_ready(hyperprior_proba_model(y2, mu2, sigma2))
    proba2_ref = _reference(y2, mu2, sigma2)
    assert proba2.shape == (3, 5, 7, 11)
    assert bool(jnp.all(jnp.isfinite(proba2)))
    assert jnp.allclose(proba2, proba2_ref, rtol=1e-5, atol=1e-6), float(
        jnp.max(jnp.abs(proba2 - proba2_ref)))

    print("KERNEL_OK")
</pallas_src>

<mosaic_0001>
module attributes {stable_mosaic.version = 11 : i64} {
  func.func @_laplace_interval_kernel(%arg0: i32, %arg1: memref<2x1024xf32, #tpu.memory_space<vmem>>, %arg2: memref<2x1024xf32, #tpu.memory_space<vmem>>, %arg3: memref<2x1024xf32, #tpu.memory_space<vmem>>, %arg4: memref<2x1024xf32, #tpu.memory_space<vmem>>) attributes {dimension_semantics = [#tpu.dimension_semantics<parallel>], iteration_bounds = array<i64: 1>, scalar_prefetch = 0 : i64, scratch_operands = 0 : i64, tpu.core_type = #tpu.core_type<tc>, window_params = [{transform_indices = @transform_0, window_bounds = array<i64: 2, 1024>}, {transform_indices = @transform_1, window_bounds = array<i64: 2, 1024>}, {transform_indices = @transform_2, window_bounds = array<i64: 2, 1024>}, {transform_indices = @transform_3, window_bounds = array<i64: 2, 1024>}]} {
    %c0 = arith.constant 0 : index
    %c0_0 = arith.constant 0 : index
    %0 = vector.load %arg1[%c0, %c0_0] : memref<2x1024xf32, #tpu.memory_space<vmem>>, vector<2x1024xf32>
    %c0_1 = arith.constant 0 : index
    %c0_2 = arith.constant 0 : index
    %1 = vector.load %arg2[%c0_1, %c0_2] : memref<2x1024xf32, #tpu.memory_space<vmem>>, vector<2x1024xf32>
    %c0_3 = arith.constant 0 : index
    %c0_4 = arith.constant 0 : index
    %2 = vector.load %arg3[%c0_3, %c0_4] : memref<2x1024xf32, #tpu.memory_space<vmem>>, vector<2x1024xf32>
    %3 = tpu.reciprocal %2 : vector<2x1024xf32> -> vector<2x1024xf32>
    %cst = arith.constant 1.41421354 : f32
    %4 = vector.broadcast %cst : f32 to vector<2x1024xf32>
    %5 = arith.mulf %4, %3 : vector<2x1024xf32>
    %6 = arith.subf %0, %1 : vector<2x1024xf32>
    %cst_5 = arith.constant 5.000000e-01 : f32
    %7 = vector.broadcast %cst_5 : f32 to vector<2x1024xf32>
    %8 = arith.addf %6, %7 : vector<2x1024xf32>
    %cst_6 = arith.constant 5.000000e-01 : f32
    %9 = vector.broadcast %cst_6 : f32 to vector<2x1024xf32>
    %10 = arith.subf %6, %9 : vector<2x1024xf32>
    %11 = math.absf %8 : vector<2x1024xf32>
    %cst_7 = arith.constant 0.000000e+00 : f32
    %12 = vector.broadcast %cst_7 : f32 to vector<2x1024xf32>
    %13 = arith.subf %12, %11 : vector<2x1024xf32>
    %14 = arith.mulf %13, %5 : vector<2x1024xf32>
    %15 = math.exp %14 : vector<2x1024xf32>
    %cst_8 = arith.constant 5.000000e-01 : f32
    %16 = vector.broadcast %cst_8 : f32 to vector<2x1024xf32>
    %17 = arith.mulf %16, %15 : vector<2x1024xf32>
    %18 = math.absf %10 : vector<2x1024xf32>
    %cst_9 = arith.constant 0.000000e+00 : f32
    %19 = vector.broadcast %cst_9 : f32 to vector<2x1024xf32>
    %20 = arith.subf %19, %18 : vector<2x1024xf32>
    %21 = arith.mulf %20, %5 : vector<2x1024xf32>
    %22 = math.exp %21 : vector<2x1024xf32>
    %cst_10 = arith.constant 5.000000e-01 : f32
    %23 = vector.broadcast %cst_10 : f32 to vector<2x1024xf32>
    %24 = arith.mulf %23, %22 : vector<2x1024xf32>
    %cst_11 = arith.constant 0.000000e+00 : f32
    %25 = vector.broadcast %cst_11 : f32 to vector<2x1024xf32>
    %26 = arith.cmpf oge, %8, %25 : vector<2x1024xf32>
    %cst_12 = arith.constant 1.000000e+00 : f32
    %27 = vector.broadcast %cst_12 : f32 to vector<2x1024xf32>
    %28 = arith.subf %27, %17 : vector<2x1024xf32>
    %29 = arith.select %26, %28, %17 : vector<2x1024xi1>, vector<2x1024xf32>
    %cst_13 = arith.constant 0.000000e+00 : f32
    %30 = vector.broadcast %cst_13 : f32 to vector<2x1024xf32>
    %31 = arith.cmpf oge, %10, %30 : vector<2x1024xf32>
    %cst_14 = arith.constant 1.000000e+00 : f32
    %32 = vector.broadcast %cst_14 : f32 to vector<2x1024xf32>
    %33 = arith.subf %32, %24 : vector<2x1024xf32>
    %34 = arith.select %31, %33, %24 : vector<2x1024xi1>, vector<2x1024xf32>
    %35 = arith.subf %29, %34 : vector<2x1024xf32>
    %c0_15 = arith.constant 0 : index
    %c0_16 = arith.constant 0 : index
    %36 = vector.load %arg4[%c0_15, %c0_16] : memref<2x1024xf32, #tpu.memory_space<vmem>>, vector<2x1024xf32>
    tpu.vector_store %arg4[%c0_15, %c0_16], %35 {strides = array<i32>} : memref<2x1024xf32, #tpu.memory_space<vmem>>, vector<2x1024xf32>,
    return
  }
  func.func @transform_0(%arg0: i32) -> (i32, i32) {
    %c0_i32 = arith.constant 0 : i32
    %c0_i32_0 = arith.constant 0 : i32
    return %arg0, %c0_i32 : i32, i32
  }
  func.func @transform_1(%arg0: i32) -> (i32, i32) {
    %c0_i32 = arith.constant 0 : i32
    %c0_i32_0 = arith.constant 0 : i32
    return %arg0, %c0_i32 : i32, i32
  }
  func.func @transform_2(%arg0: i32) -> (i32, i32) {
    %c0_i32 = arith.constant 0 : i32
    %c0_i32_0 = arith.constant 0 : i32
    return %arg0, %c0_i32 : i32, i32
  }
  func.func @transform_3(%arg0: i32) -> (i32, i32) {
    %c0_i32 = arith.constant 0 : i32
    %c0_i32_0 = arith.constant 0 : i32
    return %arg0, %c0_i32 : i32, i32
  }
}

</mosaic_0001>

<llo_original>
// kernel: tpu_custom_call.1
$region0: #{tpu_custom_call.1}
  #allocation0 [shape = 'u32[]', space=smem, size = 0x4, offset = 0x4, fixed_abs, tag = 'smem constant byte address 0x4 - core index']
  #allocation1 [shape = 'u32[144,128]{1,0:T(1,128)}', space=vmem, size = 0x12000, scoped, tag = 'internal scratch']
  %s0 = inlined_call_operand.hbm [shape: f32[2,1024], index: 0, kind: input, shape index: {}]
  %s1 = inlined_call_operand.hbm [shape: f32[2,1024], index: 1, kind: input, shape index: {}]
  %s2 = inlined_call_operand.hbm [shape: f32[2,1024], index: 2, kind: input, shape index: {}]
  %s3 = inlined_call_operand.hbm [shape: f32[2,1024], index: 3, kind: output, shape index: {}]
  %s4 = sld [smem:[#allocation0]]
  $region34: #{tpu_custom_call.1} parent=0
    _
  %s6 = ssub.s32 1, %s4
  %s7 = scalar_select 0, %s6, %s4
  $region1: #{tpu_custom_call.1} parent=0
    #allocation2 [shape = 'u8[8192]{0}', space=vmem, size = 0x2000, scoped, tag = 'input window, operand 0, single buffered']
    #allocation3 [shape = 's32[1]{0}', space=sflag, size = 0x4, scoped, tag = 'scoped memory for tpu_custom_call.1']
    #allocation4 [shape = 's32[1]{0}', space=sflag, size = 0x4, scoped, tag = 'scoped memory for tpu_custom_call.1']
    #allocation5 [shape = 'u8[8192]{0}', space=vmem, size = 0x2000, scoped, tag = 'input window, operand 1, single buffered']
    #allocation6 [shape = 's32[1]{0}', space=sflag, size = 0x4, scoped, tag = 'scoped memory for tpu_custom_call.1']
    #allocation7 [shape = 'u8[8192]{0}', space=vmem, size = 0x2000, scoped, tag = 'input window, operand 2, single buffered']
    #allocation8 [shape = 'u8[8192]{0}', space=vmem, size = 0x2000, scoped, tag = 'output window, operand 0, single buffered']
    %8 = vsyncpa [#allocation3], 0
    %9 = vsyncpa [#allocation6], 0
    %10 = vsyncpa [#allocation4], 0
    // Predicated region
    $region2: #{tpu_custom_call.1} parent=1 // pred_check
      _
    $region3: #{tpu_custom_call.1} parent=1 // pred_check_branch
      %12 = sbr.rel (0) target = $region5
    $region4: #{tpu_custom_call.1} parent=1 // pred_region
      %s14 = ssub.s32 256, 256
      %15 = vsyncadd [#allocation3], %s14
      %s17 = sshll.u32 [#allocation2], 4
      %s18 = int_to_ptr.vmem [resolvable:$true] %s17
      %20 = dma.hbm_to_vmem [thread:$0]  %s0, 256, %s18, [#allocation3]
    $region5: #{tpu_custom_call.1} parent=1 // pred_fallthru
      _
    // Predicated region
    $region6: #{tpu_custom_call.1} parent=1 // pred_check
      _
    $region7: #{tpu_custom_call.1} parent=1 // pred_check_branch
      %22 = sbr.rel (0) target = $region9
    $region8: #{tpu_custom_call.1} parent=1 // pred_region
      %s24 = ssub.s32 256, 256
      %25 = vsyncadd [#allocation6], %s24
      %s27 = sshll.u32 [#allocation5], 4
      %s28 = int_to_ptr.vmem [resolvable:$true] %s27
      %30 = dma.hbm_to_vmem [thread:$0]  %s1, 256, %s28, [#allocation6]
    $region9: #{tpu_custom_call.1} parent=1 // pred_fallthru
      _
    // Predicated region
    $region10: #{tpu_custom_call.1} parent=1 // pred_check
      _
    $region11: #{tpu_custom_call.1} parent=1 // pred_check_branch
      %32 = sbr.rel (0) target = $region13
    $region12: #{tpu_custom_call.1} parent=1 // pred_region
      %s34 = ssub.s32 256, 256
      %35 = vsyncadd [#allocation6], %s34
      %s37 = sshll.u32 [#allocation7], 4
      %s38 = int_to_ptr.vmem [resolvable:$true] %s37
      %40 = dma.hbm_to_vmem [thread:$0]  %s2, 256, %s38, [#allocation6]
    $region13: #{tpu_custom_call.1} parent=1 // pred_fallthru
      _
    // Predicated region
    $region14: #{tpu_custom_call.1} parent=1 // pred_check
      _
    $region15: #{tpu_custom_call.1} parent=1 // pred_check_branch
      %42 = sbr.rel (0) target = $region17
    $region16: #{tpu_custom_call.1} parent=1 // pred_region
      %43 = dma.done [#allocation3], 256
    $region17: #{tpu_custom_call.1} parent=1 // pred_fallthru
      _
    // Predicated region
    $region18: #{tpu_custom_call.1} parent=1 // pred_check
      _
    $region19: #{tpu_custom_call.1} parent=1 // pred_check_branch
      %45 = sbr.rel (0) target = $region21
    $region20: #{tpu_custom_call.1} parent=1 // pred_region
      %46 = dma.done [#allocation6], 256
    $region21: #{tpu_custom_call.1} parent=1 // pred_fallthru
      _
    // Predicated region
    $region22: #{tpu_custom_call.1} parent=1 // pred_check
      _
    $region23: #{tpu_custom_call.1} parent=1 // pred_check_branch
      %48 = sbr.rel (0) target = $region25
    $region24: #{tpu_custom_call.1} parent=1 // pred_region
      %49 = dma.done [#allocation6], 256
    $region25: #{tpu_custom_call.1} parent=1 // pred_fallthru
      _
    %v50 = vld [vmem:[#allocation2] sm:$0xff]
    %v51 = vld [vmem:[#allocation2 + $0x8] sm:$0xff]
    %v52 = vld [vmem:[#allocation5] sm:$0xff]
    %v53 = vld [vmem:[#allocation5 + $0x8] sm:$0xff]
    %v54 = vld [vmem:[#allocation7] sm:$0xff]
    %v55 = vld [vmem:[#allocation7 + $0x8] sm:$0xff]
    %v56 = vrcp.pop %v54
    %v57 = vrcp.pop %v55
    %v58 = vmul.f32 %v56, 1.4142135
    %v59 = vmul.f32 %v57, 1.4142135
    %v60 = vsub.f32 %v50, %v52
    %v61 = vsub.f32 %v51, %v53
    %v62 = vadd.f32 %v60, 0.5
    %v63 = vadd.f32 %v61, 0.5
    %v64 = vsub.f32 %v60, 0.5
    %v65 = vsub.f32 %v61, 0.5
    %v66 = vand.u32 2147483647, %v62
    %v67 = vand.u32 2147483647, %v63
    %v68 = vsub.f32 0.0, %v66
    %v69 = vsub.f32 0.0, %v67
    %v70 = vmul.f32 %v68, %v58
    %v71 = vmul.f32 %v69, %v59
    %v72 = vmul.f32 %v70, 1.442695
    %v73 = vpow.pop %v72
    %v74 = vmul.f32 %v71, 1.442695
    %v75 = vpow.pop %v74
    %v76 = vmul.f32 %v73, 0.5
    %v77 = vmul.f32 %v75, 0.5
    %v78 = vand.u32 2147483647, %v64
    %v79 = vand.u32 2147483647, %v65
    %v80 = vsub.f32 0.0, %v78
    %v81 = vsub.f32 0.0, %v79
    %v82 = vmul.f32 %v80, %v58
    %v83 = vmul.f32 %v81, %v59
    %v84 = vmul.f32 %v82, 1.442695
    %v85 = vpow.pop %v84
    %v86 = vmul.f32 %v83, 1.442695
    %v87 = vpow.pop %v86
    %v88 = vmul.f32 %v85, 0.5
    %v89 = vmul.f32 %v87, 0.5
    %vm90 = vcmp.ge.f32.partialorder %v62, 0.0
    %vm91 = vcmp.ge.f32.partialorder %v63, 0.0
    %v92 = vsub.f32 1.0, %v76
    %v93 = vsub.f32 1.0, %v77
    %v94 = vsel %vm90, %v92, %v76
    %v95 = vsel %vm91, %v93, %v77
    %vm96 = vcmp.ge.f32.partialorder %v64, 0.0
    %vm97 = vcmp.ge.f32.partialorder %v65, 0.0
    %v98 = vsub.f32 1.0, %v88
    %v99 = vsub.f32 1.0, %v89
    %v100 = vsel %vm96, %v98, %v88
    %v101 = vsel %vm97, %v99, %v89
    %v102 = vsub.f32 %v94, %v100
    %v103 = vsub.f32 %v95, %v101
    %104 = vst [vmem:[#allocation8] sm:$0xff] %v102
    %105 = vst [vmem:[#allocation8 + $0x8] sm:$0xff] %v103
    // Predicated region
    $region26: #{tpu_custom_call.1} parent=1 // pred_check
      _
    $region27: #{tpu_custom_call.1} parent=1 // pred_check_branch
      %107 = sbr.rel (0) target = $region29
    $region28: #{tpu_custom_call.1} parent=1 // pred_region
      %s109 = ssub.s32 256, 256
      %110 = vsyncadd [#allocation4], %s109
      %s112 = sshll.u32 [#allocation8], 4
      %s113 = int_to_ptr.vmem [resolvable:$true] %s112
      %115 = dma.vmem_to_hbm [thread:$0]  %s113, 256, %s3, [#allocation4]
    $region29: #{tpu_custom_call.1} parent=1 // pred_fallthru
      _
    // Predicated region
    $region30: #{tpu_custom_call.1} parent=1 // pred_check
      _
    $region31: #{tpu_custom_call.1} parent=1 // pred_check_branch
      %117 = sbr.rel (0) target = $region33
    $region32: #{tpu_custom_call.1} parent=1 // pred_region
      %118 = dma.done [#allocation4], 256
    $region33: #{tpu_custom_call.1} parent=1 // pred_fallthru
      _
    %119 = vsyncpa [#allocation3], 1
    %120 = vsyncpa [#allocation6], 1
    %121 = vsyncpa [#allocation4], 1

</llo_original>
